<compile_context>
chip_gen: v5e
topology: v5e:2x2
jax: 0.10.0
libtpu: 0.0.40
codegen_flags: <defaults>
</compile_context>

<pallas_src>
import functools

import jax
import jax.numpy as jnp
from jax.experimental import pallas as pl
from jax.experimental.pallas import tpu as pltpu


def _round_up(n, m):
    return ((n + m - 1) // m) * m


def _cdiv(a, b):
    return -(-a // b)


_ACTIVATIONS = {
    "relu": lambda h: jnp.maximum(h, 0.0),
    "tanh": jnp.tanh,
    "gelu": jax.nn.gelu,
    "sigmoid": jax.nn.sigmoid,
}


def _vmem_capacity_bytes():
    """Physical VMEM per TensorCore; conservative default (v7x: 64 MiB)."""
    try:
        return int(pltpu.get_tpu_info().vmem_capacity_bytes)
    except Exception:
        return 64 * 1024 * 1024


def _resident_block_spec(shape):
    """Spec for an operand identical at every grid step: constant index_map
    (stays VMEM-resident across batch tiles) and single-buffered."""
    index_map = lambda i: (0,) * len(shape)
    try:
        return pl.BlockSpec(shape, index_map, pipeline_mode=pl.Buffered(1))
    except TypeError:  # older JAX without pipeline_mode on BlockSpec
        return pl.BlockSpec(shape, index_map)


def _choose_batch_tiling(B, itemsize, widest_dim):
    """Pick (b_pad, tile_b): pad only to the sublane multiple and always emit
    >= 2 batch tiles so v7x's two TensorCores both get work."""
    align = 8 if itemsize >= 4 else 16
    # Cap the batch tile for very wide hidden layers so (tb, widest) f32
    # intermediates stay small relative to VMEM.
    max_tb = 128 if widest_dim > 4096 else 256
    b_aligned = max(_round_up(B, align), align)
    n_tiles = max(2, _cdiv(b_aligned, max_tb))
    tb = _round_up(_cdiv(b_aligned, n_tiles), align)
    return n_tiles * tb, tb


# ---------------------------------------------------------------------------
# Fused whole-MLP kernel (all weights VMEM-resident, grid over batch tiles)
# ---------------------------------------------------------------------------
def _mlp_fused_kernel(*refs, n_layers, activation):
    # refs = (x_ref, w0_ref, b0_ref, ..., w{L-1}_ref, b{L-1}_ref, o_ref)
    x_ref = refs[0]
    o_ref = refs[-1]
    act = _ACTIVATIONS[activation]

    h = x_ref[...]
    for i in range(n_layers):
        w_ref = refs[1 + 2 * i]
        b_ref = refs[2 + 2 * i]
        # MXU matmul: inputs in the weight dtype (bf16 by default), f32 acc.
        h = jnp.dot(h.astype(w_ref.dtype), w_ref[...],
                    preferred_element_type=jnp.float32)
        h = h + b_ref[...].astype(jnp.float32)
        if i < n_layers - 1:
            h = act(h)
    o_ref[...] = h.astype(o_ref.dtype)


def _mlp_fused_call(x_pad, padded_params, tb, out_dtype, dL_pad,
                    activation, vmem_limit):
    n_layers = len(padded_params)
    b_pad, d0_pad = x_pad.shape
    grid = (b_pad // tb,)

    in_specs = [pl.BlockSpec((tb, d0_pad), lambda i: (i, 0))]
    operands = [x_pad]
    for w_p, b_p in padded_params:
        in_specs.append(_resident_block_spec(w_p.shape))
        in_specs.append(_resident_block_spec(b_p.shape))
        operands.append(w_p)
        operands.append(b_p)
    out_spec = pl.BlockSpec((tb, dL_pad), lambda i: (i, 0))

    flops = sum(2 * b_pad * w.shape[0] * w.shape[1] for w, _ in padded_params)
    bytes_accessed = x_pad.size * x_pad.dtype.itemsize
    bytes_accessed += sum(w.size * w.dtype.itemsize + b.size * b.dtype.itemsize
                          for w, b in padded_params)
    bytes_accessed += b_pad * dL_pad * jnp.dtype(out_dtype).itemsize

    return pl.pallas_call(
        functools.partial(_mlp_fused_kernel, n_layers=n_layers,
                          activation=activation),
        out_shape=jax.ShapeDtypeStruct((b_pad, dL_pad), out_dtype),
        grid=grid,
        in_specs=in_specs,
        out_specs=out_spec,
        compiler_params=pltpu.CompilerParams(
            dimension_semantics=("parallel",),
            vmem_limit_bytes=vmem_limit,
        ),
        cost_estimate=pl.CostEstimate(
            flops=flops, transcendentals=0, bytes_accessed=bytes_accessed),
    )(*operands)


# ---------------------------------------------------------------------------
# Fallback: per-layer streamed matmul (weights too large to stay resident)
# ---------------------------------------------------------------------------
def _pick_feature_tile(dim_p, max_blocks=4):
    blocks = dim_p // 128
    for m in range(min(max_blocks, blocks), 0, -1):
        if blocks % m == 0:
            return 128 * m
    return 128


def _linear_streamed_kernel(x_ref, w_ref, b_ref, o_ref, acc_ref, *,
                            apply_act, activation):
    @pl.when(pl.program_id(2) == 0)
    def _():
        acc_ref[...] = jnp.zeros_like(acc_ref)

    acc_ref[...] += jnp.dot(x_ref[...].astype(w_ref.dtype), w_ref[...],
                            preferred_element_type=jnp.float32)

    @pl.when(pl.program_id(2) == pl.num_programs(2) - 1)
    def _():
        h = acc_ref[...] + b_ref[...].astype(jnp.float32)
        if apply_act:
            h = _ACTIVATIONS[activation](h)
        o_ref[...] = h.astype(o_ref.dtype)


def _linear_streamed_call(x_pad, w_pad, b_vec, *, apply_act, activation,
                          out_dtype, tb, vmem_limit):
    b_p, din_p = x_pad.shape
    _, dout_p = w_pad.shape
    tk = _pick_feature_tile(din_p)
    tn = _pick_feature_tile(dout_p)
    grid = (b_p // tb, dout_p // tn, din_p // tk)
    return pl.pallas_call(
        functools.partial(_linear_streamed_kernel, apply_act=apply_act,
                          activation=activation),
        out_shape=jax.ShapeDtypeStruct((b_p, dout_p), out_dtype),
        grid=grid,
        in_specs=[
            pl.BlockSpec((tb, tk), lambda i, j, k: (i, k)),
            pl.BlockSpec((tk, tn), lambda i, j, k: (k, j)),
            pl.BlockSpec((1, tn), lambda i, j, k: (0, j)),
        ],
        out_specs=pl.BlockSpec((tb, tn), lambda i, j, k: (i, j)),
        scratch_shapes=[pltpu.VMEM((tb, tn), jnp.float32)],
        compiler_params=pltpu.CompilerParams(
            dimension_semantics=("parallel", "parallel", "arbitrary"),
            vmem_limit_bytes=vmem_limit,
        ),
    )(x_pad, w_pad, b_vec)


# ---------------------------------------------------------------------------
# Forward driver
# ---------------------------------------------------------------------------
def mlp_pallas_forward(x, padded_params, orig_dims, padded_dims, out_dtype,
                       activation="relu"):
    n_layers = len(padded_params)
    B, Din = x.shape
    assert Din == orig_dims[0]

    d0_pad = padded_dims[0]
    dL, dL_pad = orig_dims[-1], padded_dims[-1]
    widest = max(padded_dims)

    b_pad, tb = _choose_batch_tiling(B, jnp.dtype(x.dtype).itemsize, widest)

    x_pad = x
    if (b_pad, d0_pad) != (B, Din):  # skip the extra HBM pass when aligned
        x_pad = jnp.pad(x, ((0, b_pad - B), (0, d0_pad - Din)))

    # --- VMEM budget: can the whole weight set stay resident? ----------------
    vmem_cap = _vmem_capacity_bytes()
    weight_bytes = sum(w.size * w.dtype.itemsize + b.size * b.dtype.itemsize
                       for w, b in padded_params)          # single-buffered
    act_bytes = 2 * tb * d0_pad * x_pad.dtype.itemsize      # input, double-buf
    act_bytes += 2 * tb * dL_pad * jnp.dtype(out_dtype).itemsize  # output
    live_bytes = 4 * tb * widest * 4                        # f32 intermediates + scratch
    resident_est = weight_bytes + act_bytes + live_bytes

    if resident_est <= int(0.7 * vmem_cap):
        vmem_limit = min(vmem_cap,
                         max(32 * 1024 * 1024, resident_est + (8 << 20)))
        out_pad = _mlp_fused_call(x_pad, padded_params, tb, out_dtype, dL_pad,
                                  activation, vmem_limit)
    else:
        # Weights don't fit residently (e.g. wide layers vs v7x's 64 MiB VMEM):
        # stream each layer's weight K/N-tiled with an f32 VMEM accumulator.
        vmem_limit = min(vmem_cap, 64 * 1024 * 1024)
        h = x_pad
        for i, (w_p, b_p) in enumerate(padded_params):
            last = (i == n_layers - 1)
            h = _linear_streamed_call(
                h, w_p, b_p, apply_act=not last, activation=activation,
                out_dtype=out_dtype if last else w_p.dtype,  # bf16 between layers
                tb=tb, vmem_limit=vmem_limit)
        out_pad = h

    if (b_pad, dL_pad) != (B, dL):
        return out_pad[:B, :dL]
    return out_pad


class MLPPallas:
    """Mirrors the PyTorch MLP: Linear layers with an activation between every
    pair of consecutive layers except after the last one. Weights are stored
    bf16 (MXU-native) and zero-padded to 128-multiple feature dims at init."""

    def __init__(self, layer_dims, key, dtype=jnp.bfloat16, activation="relu"):
        self.layer_dims = list(layer_dims)
        self.padded_dims = [_round_up(d, 128) for d in layer_dims]
        self.dtype = dtype
        self.activation = activation

        self.params = []          # unpadded f32 (w, b), PyTorch-equivalent values
        self.padded_params = []   # zero-padded (w_pad (Din_p,Dout_p), b_pad (1,Dout_p))
        for i in range(len(layer_dims) - 1):
            key, kw, kb = jax.random.split(key, 3)
            fan_in, fan_out = layer_dims[i], layer_dims[i + 1]
            bound = 1.0 / float(jnp.sqrt(fan_in))
            # PyTorch nn.Linear default init, stored transposed as (in, out).
            w = jax.random.uniform(kw, (fan_in, fan_out), jnp.float32, -bound, bound)
            b = jax.random.uniform(kb, (fan_out,), jnp.float32, -bound, bound)
            self.params.append((w, b))

            din_p, dout_p = self.padded_dims[i], self.padded_dims[i + 1]
            w_pad = jnp.zeros((din_p, dout_p), dtype).at[:fan_in, :fan_out].set(
                w.astype(dtype))
            b_pad = jnp.zeros((1, dout_p), dtype).at[0, :fan_out].set(
                b.astype(dtype))
            self.padded_params.append((w_pad, b_pad))

    def __call__(self, x):
        return mlp_pallas_forward(
            x, self.padded_params, self.layer_dims, self.padded_dims,
            out_dtype=x.dtype, activation=self.activation)

    def reference_fp32(self, x):
        """Pure-JAX f32 reference (PyTorch-equivalent numerics)."""
        act = _ACTIVATIONS[self.activation]
        n = len(self.params)
        for i, (w, b) in enumerate(self.params):
            x = x @ w + b
            if i < n - 1:
                x = act(x)
        return x

    def reference_kernel_numerics(self, x):
        """Pure-JAX reference mimicking the kernel's casts (bf16 matmul inputs,
        f32 accumulation) — for tight correctness checks."""
        act = _ACTIVATIONS[self.activation]
        n = len(self.params)
        h = x
        for i, (w, b) in enumerate(self.params):
            h = jnp.dot(h.astype(self.dtype), w.astype(self.dtype),
                        preferred_element_type=jnp.float32)
            h = h + b.astype(self.dtype).astype(jnp.float32)
            if i < n - 1:
                h = act(h)
        return h.astype(x.dtype)


if __name__ == "__main__":
    key = jax.random.PRNGKey(0)
    key, kx, kp = jax.random.split(key, 3)

    # Small shapes consistent with the module: MLP([32, 64, 64, 16], nn.ReLU())
    layer_dims = [32, 64, 64, 16]
    batch = 8
    x = jax.random.normal(kx, (batch, layer_dims[0]), jnp.float32)

    mlp = MLPPallas(layer_dims, kp)   # bf16 weights, ReLU

    fwd = jax.jit(mlp.__call__)
    out = jax.block_until_ready(fwd(x))

    assert out.shape == (batch, layer_dims[-1]), out.shape

    # Tight check vs a reference that uses the same bf16-in / f32-acc numerics.
    ref_bf16 = mlp.reference_kernel_numerics(x)
    assert jnp.allclose(out, ref_bf16, atol=2e-3, rtol=2e-3), \
        "mismatch vs bf16-numerics reference"

    # Loose sanity check vs the f32 (PyTorch-equivalent) reference; bf16 weight
    # storage diverges from f32 beyond 1e-5, which is expected.
    ref_f32 = mlp.reference_fp32(x)
    assert jnp.allclose(out, ref_f32, atol=5e-2, rtol=5e-2), \
        "mismatch vs f32 reference"

    print("KERNEL_OK")
</pallas_src>

<mosaic_0001>
module attributes {stable_mosaic.version = 11 : i64} {
  func.func @_mlp_fused_kernel(%arg0: i32, %arg1: memref<8x128xf32, #tpu.memory_space<vmem>>, %arg2: memref<128x128xbf16, #tpu.memory_space<vmem>>, %arg3: memref<1x128xbf16, #tpu.memory_space<vmem>>, %arg4: memref<128x128xbf16, #tpu.memory_space<vmem>>, %arg5: memref<1x128xbf16, #tpu.memory_space<vmem>>, %arg6: memref<128x128xbf16, #tpu.memory_space<vmem>>, %arg7: memref<1x128xbf16, #tpu.memory_space<vmem>>, %arg8: memref<8x128xf32, #tpu.memory_space<vmem>>) attributes {dimension_semantics = [#tpu.dimension_semantics<parallel>], iteration_bounds = array<i64: 2>, scalar_prefetch = 0 : i64, scratch_operands = 0 : i64, tpu.core_type = #tpu.core_type<tc>, window_params = [{transform_indices = @transform_0, window_bounds = array<i64: 8, 128>}, {pipeline_mode = #tpu.pipeline_mode<synchronous>, transform_indices = @transform_1, window_bounds = array<i64: 128, 128>}, {pipeline_mode = #tpu.pipeline_mode<synchronous>, transform_indices = @transform_2, window_bounds = array<i64: 1, 128>}, {pipeline_mode = #tpu.pipeline_mode<synchronous>, transform_indices = @transform_3, window_bounds = array<i64: 128, 128>}, {pipeline_mode = #tpu.pipeline_mode<synchronous>, transform_indices = @transform_4, window_bounds = array<i64: 1, 128>}, {pipeline_mode = #tpu.pipeline_mode<synchronous>, transform_indices = @transform_5, window_bounds = array<i64: 128, 128>}, {pipeline_mode = #tpu.pipeline_mode<synchronous>, transform_indices = @transform_6, window_bounds = array<i64: 1, 128>}, {transform_indices = @transform_7, window_bounds = array<i64: 8, 128>}]} {
    %c0 = arith.constant 0 : index
    %c0_0 = arith.constant 0 : index
    %0 = vector.load %arg1[%c0, %c0_0] : memref<8x128xf32, #tpu.memory_space<vmem>>, vector<8x128xf32>
    %1 = arith.truncf %0 : vector<8x128xf32> to vector<8x128xbf16>
    %c0_1 = arith.constant 0 : index
    %c0_2 = arith.constant 0 : index
    %2 = vector.load %arg2[%c0_1, %c0_2] : memref<128x128xbf16, #tpu.memory_space<vmem>>, vector<128x128xbf16>
    %cst = arith.constant dense<0.000000e+00> : vector<8x128xf32>
    %3 = tpu.matmul %1, %2, %cst {dimension_numbers = #tpu.dot_dimension_numbers<[1], [0], [0], [1], [0, 0, 1, 1], [], []>} : vector<8x128xbf16>, vector<128x128xbf16>, vector<8x128xf32> -> vector<8x128xf32>
    %c0_3 = arith.constant 0 : index
    %c0_4 = arith.constant 0 : index
    %4 = vector.load %arg3[%c0_3, %c0_4] : memref<1x128xbf16, #tpu.memory_space<vmem>>, vector<1x128xbf16>
    %5 = arith.extf %4 : vector<1x128xbf16> to vector<1x128xf32>
    %6 = vector.broadcast %5 : vector<1x128xf32> to vector<8x128xf32>
    %7 = arith.addf %3, %6 : vector<8x128xf32>
    %cst_5 = arith.constant 0.000000e+00 : f32
    %8 = vector.broadcast %cst_5 : f32 to vector<8x128xf32>
    %9 = arith.maximumf %7, %8 : vector<8x128xf32>
    %10 = arith.truncf %9 : vector<8x128xf32> to vector<8x128xbf16>
    %c0_6 = arith.constant 0 : index
    %c0_7 = arith.constant 0 : index
    %11 = vector.load %arg4[%c0_6, %c0_7] : memref<128x128xbf16, #tpu.memory_space<vmem>>, vector<128x128xbf16>
    %cst_8 = arith.constant dense<0.000000e+00> : vector<8x128xf32>
    %12 = tpu.matmul %10, %11, %cst_8 {dimension_numbers = #tpu.dot_dimension_numbers<[1], [0], [0], [1], [0, 0, 1, 1], [], []>} : vector<8x128xbf16>, vector<128x128xbf16>, vector<8x128xf32> -> vector<8x128xf32>
    %c0_9 = arith.constant 0 : index
    %c0_10 = arith.constant 0 : index
    %13 = vector.load %arg5[%c0_9, %c0_10] : memref<1x128xbf16, #tpu.memory_space<vmem>>, vector<1x128xbf16>
    %14 = arith.extf %13 : vector<1x128xbf16> to vector<1x128xf32>
    %15 = vector.broadcast %14 : vector<1x128xf32> to vector<8x128xf32>
    %16 = arith.addf %12, %15 : vector<8x128xf32>
    %cst_11 = arith.constant 0.000000e+00 : f32
    %17 = vector.broadcast %cst_11 : f32 to vector<8x128xf32>
    %18 = arith.maximumf %16, %17 : vector<8x128xf32>
    %19 = arith.truncf %18 : vector<8x128xf32> to vector<8x128xbf16>
    %c0_12 = arith.constant 0 : index
    %c0_13 = arith.constant 0 : index
    %20 = vector.load %arg6[%c0_12, %c0_13] : memref<128x128xbf16, #tpu.memory_space<vmem>>, vector<128x128xbf16>
    %cst_14 = arith.constant dense<0.000000e+00> : vector<8x128xf32>
    %21 = tpu.matmul %19, %20, %cst_14 {dimension_numbers = #tpu.dot_dimension_numbers<[1], [0], [0], [1], [0, 0, 1, 1], [], []>} : vector<8x128xbf16>, vector<128x128xbf16>, vector<8x128xf32> -> vector<8x128xf32>
    %c0_15 = arith.constant 0 : index
    %c0_16 = arith.constant 0 : index
    %22 = vector.load %arg7[%c0_15, %c0_16] : memref<1x128xbf16, #tpu.memory_space<vmem>>, vector<1x128xbf16>
    %23 = arith.extf %22 : vector<1x128xbf16> to vector<1x128xf32>
    %24 = vector.broadcast %23 : vector<1x128xf32> to vector<8x128xf32>
    %25 = arith.addf %21, %24 : vector<8x128xf32>
    %c0_17 = arith.constant 0 : index
    %c0_18 = arith.constant 0 : index
    %26 = vector.load %arg8[%c0_17, %c0_18] : memref<8x128xf32, #tpu.memory_space<vmem>>, vector<8x128xf32>
    tpu.vector_store %arg8[%c0_17, %c0_18], %25 {strides = array<i32>} : memref<8x128xf32, #tpu.memory_space<vmem>>, vector<8x128xf32>,
    return
  }
  func.func @transform_0(%arg0: i32) -> (i32, i32) {
    %c0_i32 = arith.constant 0 : i32
    %c0_i32_0 = arith.constant 0 : i32
    return %arg0, %c0_i32 : i32, i32
  }
  func.func @transform_1(%arg0: i32) -> (i32, i32) {
    %c0_i32 = arith.constant 0 : i32
    %c0_i32_0 = arith.constant 0 : i32
    %c0_i32_1 = arith.constant 0 : i32
    return %c0_i32, %c0_i32_0 : i32, i32
  }
  func.func @transform_2(%arg0: i32) -> (i32, i32) {
    %c0_i32 = arith.constant 0 : i32
    %c0_i32_0 = arith.constant 0 : i32
    %c0_i32_1 = arith.constant 0 : i32
    return %c0_i32, %c0_i32_0 : i32, i32
  }
  func.func @transform_3(%arg0: i32) -> (i32, i32) {
    %c0_i32 = arith.constant 0 : i32
    %c0_i32_0 = arith.constant 0 : i32
    %c0_i32_1 = arith.constant 0 : i32
    return %c0_i32, %c0_i32_0 : i32, i32
  }
  func.func @transform_4(%arg0: i32) -> (i32, i32) {
    %c0_i32 = arith.constant 0 : i32
    %c0_i32_0 = arith.constant 0 : i32
    %c0_i32_1 = arith.constant 0 : i32
    return %c0_i32, %c0_i32_0 : i32, i32
  }
  func.func @transform_5(%arg0: i32) -> (i32, i32) {
    %c0_i32 = arith.constant 0 : i32
    %c0_i32_0 = arith.constant 0 : i32
    %c0_i32_1 = arith.constant 0 : i32
    return %c0_i32, %c0_i32_0 : i32, i32
  }
  func.func @transform_6(%arg0: i32) -> (i32, i32) {
    %c0_i32 = arith.constant 0 : i32
    %c0_i32_0 = arith.constant 0 : i32
    %c0_i32_1 = arith.constant 0 : i32
    return %c0_i32, %c0_i32_0 : i32, i32
  }
  func.func @transform_7(%arg0: i32) -> (i32, i32) {
    %c0_i32 = arith.constant 0 : i32
    %c0_i32_0 = arith.constant 0 : i32
    return %arg0, %c0_i32 : i32, i32
  }
}

</mosaic_0001>

<llo_original>
// kernel: a_call__.1
$region0: #{a_call__.1}
  #allocation0 [shape = 'u32[]', space=smem, size = 0x4, offset = 0x4, fixed_abs, tag = 'smem constant byte address 0x4 - core index']
  #allocation1 [shape = 'u32[72,128]{1,0:T(1,128)}', space=vmem, size = 0x9000, scoped, tag = 'internal scratch']
  %s0 = inlined_call_operand.vmem [shape: f32[16,128], index: 0, kind: input, shape index: {}]
  %s1 = inlined_call_operand.hbm [shape: bf16[128,128], index: 1, kind: input, shape index: {}]
  %s2 = inlined_call_operand.vmem [shape: bf16[1,128], index: 2, kind: input, shape index: {}]
  %s3 = inlined_call_operand.hbm [shape: bf16[128,128], index: 3, kind: input, shape index: {}]
  %s4 = inlined_call_operand.vmem [shape: bf16[1,128], index: 4, kind: input, shape index: {}]
  %s5 = inlined_call_operand.hbm [shape: bf16[128,128], index: 5, kind: input, shape index: {}]
  %s6 = inlined_call_operand.vmem [shape: bf16[1,128], index: 6, kind: input, shape index: {}]
  %s7 = inlined_call_operand.vmem [shape: f32[16,128], index: 7, kind: output, shape index: {}]
  %s8 = sld [smem:[#allocation0]]
  $region73: #{a_call__.1} parent=0
    _
  %s10 = ssub.s32 1, %s8
  %s11 = scalar_select 0, %s10, %s8
  $region1: #{a_call__.1} parent=0
    #allocation2 [shape = 'u8[32768]{0}', space=vmem, size = 0x8000, scoped, tag = 'input window, operand 1, single buffered']
    #allocation3 [shape = 's32[2]{0}', space=sflag, size = 0x8, scoped, tag = 'scoped memory for a_call__.1']
    #allocation4 [shape = 'u8[32768]{0}', space=vmem, size = 0x8000, scoped, tag = 'input window, operand 3, single buffered']
    #allocation5 [shape = 's32[1]{0}', space=sflag, size = 0x4, scoped, tag = 'scoped memory for a_call__.1']
    #allocation6 [shape = 'u8[32768]{0}', space=vmem, size = 0x8000, scoped, tag = 'input window, operand 5, single buffered']
    %12 = vsyncpa [#allocation3], 0
    %13 = vsyncpa [#allocation5], 0
    loop: start=0, step=1, limit=4
    $region2: #{a_call__.1} parent=1 // loop_pre_header
      _
    $region3: #{a_call__.1} parent=1 // loop_header
      %s15 = sphi 0, %s19
      %p16 = scmp.ge.s32.totalorder %s15, 4
      %s25 = sphi 0, %s27
      %s28 = sphi 0, %s25
      %s29 = sphi 0, %s28
      %s45 = sphi 0, %s29
      %s49 = sphi 0, %s49
      %s51 = sphi 0, %s49
      %s52 = sphi 0, %s51
      %s66 = sphi 0, %s52
      %s70 = sphi 0, %s70
      %s72 = sphi 0, %s70
      %s73 = sphi 0, %s72
      %s87 = sphi 0, %s73
      %s91 = sphi 0, %s91
      %s93 = sphi 0, %s91
      %s94 = sphi 0, %s93
      %s108 = sphi 0, %s94
      %s112 = sphi 0, %s112
      %s114 = sphi 0, %s112
      %s115 = sphi 0, %s114
      %s129 = sphi 0, %s115
      %s133 = sphi 0, %s133
      %s135 = sphi 0, %s133
      %s136 = sphi 0, %s135
      %s150 = sphi 0, %s136
      %s154 = sphi 0, %s154
      %s156 = sphi 0, %s154
      %s157 = sphi 0, %s156
      %s171 = sphi 0, %s157
      %s177 = sphi 0, %s179
      %s180 = sphi 0, %s177
      %s181 = sphi 0, %s180
      %s197 = sphi 0, %s181
    $region4: #{a_call__.1} parent=1 // loop_header_branch
      %18 = sbr.rel (%p16) target = $region8
    $region5: #{a_call__.1} parent=1 // loop_body
      %s20 = ssub.s32 %s15, 1
      %s21 = ssub.s32 %s15, 2
      %s22 = sadd.s32 %s15, 1
      %s23 = ssub.s32 %s15, %s22
      %p24 = scmp.eq.s32.totalorder %s23, 0
      %s26 = sadd.s32 %s25, 1
      %s27 = scalar_select %p24, %s25, %s26
      %p30 = pneg %p24
      %p31 = scmp.eq.s32.totalorder %s15, 1
      %p32 = por %p30, %p31
      %p33 = scmp.ne.s32.totalorder %s25, %s28
      %p34 = scmp.eq.s32.totalorder %s15, 0
      %p35 = por %p33, %p34
      %p36 = scmp.ne.s32.totalorder %s25, %s28
      %p37 = scmp.eq.s32.totalorder %s20, 1
      %p38 = por %p36, %p37
      %p39 = scmp.ne.s32.totalorder %s28, %s29
      %p40 = scmp.eq.s32.totalorder %s20, 0
      %p41 = por %p39, %p40
      %p42 = scmp.ne.s32.totalorder %s28, %s29
      %p43 = scmp.eq.s32.totalorder %s21, 1
      %p44 = por %p42, %p43
      %p46 = scmp.ne.s32.totalorder %s29, %s45
      %p47 = scmp.eq.s32.totalorder %s21, 0
      %p48 = por %p46, %p47
      %s50 = sadd.s32 %s49, 1
      %p53 = scmp.eq.s32.totalorder %s15, 1
      %p54 = scmp.ne.s32.totalorder %s49, %s51
      %p55 = scmp.eq.s32.totalorder %s15, 0
      %p56 = por %p54, %p55
      %p57 = scmp.ne.s32.totalorder %s49, %s51
      %p58 = scmp.eq.s32.totalorder %s20, 1
      %p59 = por %p57, %p58
      %p60 = scmp.ne.s32.totalorder %s51, %s52
      %p61 = scmp.eq.s32.totalorder %s20, 0
      %p62 = por %p60, %p61
      %p63 = scmp.ne.s32.totalorder %s51, %s52
      %p64 = scmp.eq.s32.totalorder %s21, 1
      %p65 = por %p63, %p64
      %p67 = scmp.ne.s32.totalorder %s52, %s66
      %p68 = scmp.eq.s32.totalorder %s21, 0
      %p69 = por %p67, %p68
      %s71 = sadd.s32 %s70, 1
      %p74 = scmp.eq.s32.totalorder %s15, 1
      %p75 = scmp.ne.s32.totalorder %s70, %s72
      %p76 = scmp.eq.s32.totalorder %s15, 0
      %p77 = por %p75, %p76
      %p78 = scmp.ne.s32.totalorder %s70, %s72
      %p79 = scmp.eq.s32.totalorder %s20, 1
      %p80 = por %p78, %p79
      %p81 = scmp.ne.s32.totalorder %s72, %s73
      %p82 = scmp.eq.s32.totalorder %s20, 0
      %p83 = por %p81, %p82
      %p84 = scmp.ne.s32.totalorder %s72, %s73
      %p85 = scmp.eq.s32.totalorder %s21, 1
      %p86 = por %p84, %p85
      %p88 = scmp.ne.s32.totalorder %s73, %s87
      %p89 = scmp.eq.s32.totalorder %s21, 0
      %p90 = por %p88, %p89
      %s92 = sadd.s32 %s91, 1
      %p95 = scmp.eq.s32.totalorder %s15, 1
      %p96 = scmp.ne.s32.totalorder %s91, %s93
      %p97 = scmp.eq.s32.totalorder %s15, 0
      %p98 = por %p96, %p97
      %p99 = scmp.ne.s32.totalorder %s91, %s93
      %p100 = scmp.eq.s32.totalorder %s20, 1
      %p101 = por %p99, %p100
      %p102 = scmp.ne.s32.totalorder %s93, %s94
      %p103 = scmp.eq.s32.totalorder %s20, 0
      %p104 = por %p102, %p103
      %p105 = scmp.ne.s32.totalorder %s93, %s94
      %p106 = scmp.eq.s32.totalorder %s21, 1
      %p107 = por %p105, %p106
      %p109 = scmp.ne.s32.totalorder %s94, %s108
      %p110 = scmp.eq.s32.totalorder %s21, 0
      %p111 = por %p109, %p110
      %s113 = sadd.s32 %s112, 1
      %p116 = scmp.eq.s32.totalorder %s15, 1
      %p117 = scmp.ne.s32.totalorder %s112, %s114
      %p118 = scmp.eq.s32.totalorder %s15, 0
      %p119 = por %p117, %p118
      %p120 = scmp.ne.s32.totalorder %s112, %s114
      %p121 = scmp.eq.s32.totalorder %s20, 1
      %p122 = por %p120, %p121
      %p123 = scmp.ne.s32.totalorder %s114, %s115
      %p124 = scmp.eq.s32.totalorder %s20, 0
      %p125 = por %p123, %p124
      %p126 = scmp.ne.s32.totalorder %s114, %s115
      %p127 = scmp.eq.s32.totalorder %s21, 1
      %p128 = por %p126, %p127
      %p130 = scmp.ne.s32.totalorder %s115, %s129
      %p131 = scmp.eq.s32.totalorder %s21, 0
      %p132 = por %p130, %p131
      %s134 = sadd.s32 %s133, 1
      %p137 = scmp.eq.s32.totalorder %s15, 1
      %p138 = scmp.ne.s32.totalorder %s133, %s135
      %p139 = scmp.eq.s32.totalorder %s15, 0
      %p140 = por %p138, %p139
      %p141 = scmp.ne.s32.totalorder %s133, %s135
      %p142 = scmp.eq.s32.totalorder %s20, 1
      %p143 = por %p141, %p142
      %p144 = scmp.ne.s32.totalorder %s135, %s136
      %p145 = scmp.eq.s32.totalorder %s20, 0
      %p146 = por %p144, %p145
      %p147 = scmp.ne.s32.totalorder %s135, %s136
      %p148 = scmp.eq.s32.totalorder %s21, 1
      %p149 = por %p147, %p148
      %p151 = scmp.ne.s32.totalorder %s136, %s150
      %p152 = scmp.eq.s32.totalorder %s21, 0
      %p153 = por %p151, %p152
      %s155 = sadd.s32 %s154, 1
      %p158 = scmp.eq.s32.totalorder %s15, 1
      %p159 = scmp.ne.s32.totalorder %s154, %s156
      %p160 = scmp.eq.s32.totalorder %s15, 0
      %p161 = por %p159, %p160
      %p162 = scmp.ne.s32.totalorder %s154, %s156
      %p163 = scmp.eq.s32.totalorder %s20, 1
      %p164 = por %p162, %p163
      %p165 = scmp.ne.s32.totalorder %s156, %s157
      %p166 = scmp.eq.s32.totalorder %s20, 0
      %p167 = por %p165, %p166
      %p168 = scmp.ne.s32.totalorder %s156, %s157
      %p169 = scmp.eq.s32.totalorder %s21, 1
      %p170 = por %p168, %p169
      %p172 = scmp.ne.s32.totalorder %s157, %s171
      %p173 = scmp.eq.s32.totalorder %s21, 0
      %p174 = por %p172, %p173
      %s175 = ssub.s32 %s15, %s22
      %p176 = scmp.eq.s32.totalorder %s175, 0
      %s178 = sadd.s32 %s177, 1
      %s179 = scalar_select %p176, %s177, %s178
      %p182 = pneg %p176
      %p183 = scmp.eq.s32.totalorder %s15, 1
      %p184 = por %p182, %p183
      %p185 = scmp.ne.s32.totalorder %s177, %s180
      %p186 = scmp.eq.s32.totalorder %s15, 0
      %p187 = por %p185, %p186
      %p188 = scmp.ne.s32.totalorder %s177, %s180
      %p189 = scmp.eq.s32.totalorder %s20, 1
      %p190 = por %p188, %p189
      %p191 = scmp.ne.s32.totalorder %s180, %s181
      %p192 = scmp.eq.s32.totalorder %s20, 0
      %p193 = por %p191, %p192
      %p194 = scmp.ne.s32.totalorder %s180, %s181
      %p195 = scmp.eq.s32.totalorder %s21, 1
      %p196 = por %p194, %p195
      %p198 = scmp.ne.s32.totalorder %s181, %s197
      %p199 = scmp.eq.s32.totalorder %s21, 0
      %p200 = por %p198, %p199
      %p201 = scmp.le.s32.totalorder 1, %s15
      %p202 = scmp.lt.s32.totalorder %s15, 3
      %p203 = pnand %p201, %p202
      %p204 = pneg %p203
      // Predicated region
      $region9: #{a_call__.1} parent=5 // pred_check
        _
      $region10: #{a_call__.1} parent=5 // pred_check_branch
        %206 = sbr.rel (%p203) target = $region12
      $region11: #{a_call__.1} parent=5 // pred_region
        %s207 = ssub.s32 %s15, 1
        // Predicated region
        $region13: #{a_call__.1} parent=11 // pred_check
          %p208 = pneg %p62
        $region14: #{a_call__.1} parent=11 // pred_check_branch
          %210 = sbr.rel (%p208) target = $region16
        $region15: #{a_call__.1} parent=11 // pred_region
          %212 = vsyncadd [#allocation3], 0
          %s213 = sshll.u32 %s1, 4
          %s214 = int_to_ptr.hbm [resolvable:$true] %s213
          %s215 = sshll.u32 [#allocation2], 4
          %s216 = int_to_ptr.vmem [resolvable:$true] %s215
          %221 = dma.hbm_to_vmem [thread:$0]  %s214, 1024, %s216, [#allocation3], 64, 64, 4
        $region16: #{a_call__.1} parent=11 // pred_fallthru
          _
        // Predicated region
        $region17: #{a_call__.1} parent=11 // pred_check
          %p222 = pneg %p83
        $region18: #{a_call__.1} parent=11 // pred_check_branch
          %224 = sbr.rel (%p222) target = $region20
        $region19: #{a_call__.1} parent=11 // pred_region
          _
        $region20: #{a_call__.1} parent=11 // pred_fallthru
          _
        // Predicated region
        $region21: #{a_call__.1} parent=11 // pred_check
          %p225 = pneg %p104
        $region22: #{a_call__.1} parent=11 // pred_check_branch
          %227 = sbr.rel (%p225) target = $region24
        $region23: #{a_call__.1} parent=11 // pred_region
          %229 = vsyncadd [#allocation5], 0
          %s230 = sshll.u32 %s3, 4
          %s231 = int_to_ptr.hbm [resolvable:$true] %s230
          %s232 = sshll.u32 [#allocation4], 4
          %s233 = int_to_ptr.vmem [resolvable:$true] %s232
          %238 = dma.hbm_to_vmem [thread:$0]  %s231, 1024, %s233, [#allocation5], 64, 64, 4
        $region24: #{a_call__.1} parent=11 // pred_fallthru
          _
        // Predicated region
        $region25: #{a_call__.1} parent=11 // pred_check
          %p239 = pneg %p125
        $region26: #{a_call__.1} parent=11 // pred_check_branch
          %241 = sbr.rel (%p239) target = $region28
        $region27: #{a_call__.1} parent=11 // pred_region
          _
        $region28: #{a_call__.1} parent=11 // pred_fallthru
          _
        // Predicated region
        $region29: #{a_call__.1} parent=11 // pred_check
          %p242 = pneg %p146
        $region30: #{a_call__.1} parent=11 // pred_check_branch
          %244 = sbr.rel (%p242) target = $region32
        $region31: #{a_call__.1} parent=11 // pred_region
          %246 = vsyncadd [#allocation5], 0
          %s247 = sshll.u32 %s5, 4
          %s248 = int_to_ptr.hbm [resolvable:$true] %s247
          %s249 = sshll.u32 [#allocation6], 4
          %s250 = int_to_ptr.vmem [resolvable:$true] %s249
          %255 = dma.hbm_to_vmem [thread:$0]  %s248, 1024, %s250, [#allocation5], 64, 64, 4
        $region32: #{a_call__.1} parent=11 // pred_fallthru
          _
        // Predicated region
        $region33: #{a_call__.1} parent=11 // pred_check
          %p256 = pneg %p167
        $region34: #{a_call__.1} parent=11 // pred_check_branch
          %258 = sbr.rel (%p256) target = $region36
        $region35: #{a_call__.1} parent=11 // pred_region
          _
        $region36: #{a_call__.1} parent=11 // pred_fallthru
          _
      $region12: #{a_call__.1} parent=5 // pred_fallthru
        _
      %p259 = scmp.lt.s32.totalorder %s15, 2
      // Predicated region
      $region37: #{a_call__.1} parent=5 // pred_check
        %p260 = pneg %p259
      $region38: #{a_call__.1} parent=5 // pred_check_branch
        %262 = sbr.rel (%p260) target = $region40
      $region39: #{a_call__.1} parent=5 // pred_region
        // Predicated region
        $region41: #{a_call__.1} parent=39 // pred_check
          %p263 = pneg %p35
        $region42: #{a_call__.1} parent=39 // pred_check_branch
          %265 = sbr.rel (%p263) target = $region44
        $region43: #{a_call__.1} parent=39 // pred_region
          %p266 = scmp.lt.s32.totalorder %s15, 1
          %s267 = scalar_select %p266, %s15, 1
          %s268 = smul.addr %s267, 8
          %s269 = scalar_lea.vmem %s0, %s268
        $region44: #{a_call__.1} parent=39 // pred_fallthru
          _
      $region40: #{a_call__.1} parent=5 // pred_fallthru
        _
      %p270 = scmp.le.s32.totalorder 1, %s15
      %p271 = scmp.lt.s32.totalorder %s15, 3
      %p272 = pnand %p270, %p271
      %p273 = pneg %p272
      // Predicated region
      $region45: #{a_call__.1} parent=5 // pred_check
        _
      $region46: #{a_call__.1} parent=5 // pred_check_branch
        %275 = sbr.rel (%p272) target = $region48
      $region47: #{a_call__.1} parent=5 // pred_region
        %s276 = ssub.s32 %s15, 1
        // Predicated region
        $region49: #{a_call__.1} parent=47 // pred_check
          %p277 = pneg %p62
        $region50: #{a_call__.1} parent=47 // pred_check_branch
          %279 = sbr.rel (%p277) target = $region52
        $region51: #{a_call__.1} parent=47 // pred_region
          %281 = dma.done [#allocation3], 1024
        $region52: #{a_call__.1} parent=47 // pred_fallthru
          _
        // Predicated region
        $region53: #{a_call__.1} parent=47 // pred_check
          %p282 = pneg %p104
        $region54: #{a_call__.1} parent=47 // pred_check_branch
          %284 = sbr.rel (%p282) target = $region56
        $region55: #{a_call__.1} parent=47 // pred_region
          %286 = dma.done [#allocation5], 1024
        $region56: #{a_call__.1} parent=47 // pred_fallthru
          _
        // Predicated region
        $region57: #{a_call__.1} parent=47 // pred_check
          %p287 = pneg %p146
        $region58: #{a_call__.1} parent=47 // pred_check_branch
          %289 = sbr.rel (%p287) target = $region60
        $region59: #{a_call__.1} parent=47 // pred_region
          %291 = dma.done [#allocation5], 1024
        $region60: #{a_call__.1} parent=47 // pred_fallthru
          _
        %p292 = scmp.lt.s32.totalorder %s20, 1
        %s293 = scalar_select %p292, %s20, 1
        %s294 = smul.addr %s293, 8
        %s295 = scalar_lea.vmem %s0, %s294
        %p296 = pneg %p41
        %p297 = pneg %p38
        %p298 = pneg %p62
        %p299 = pneg %p59
        %p300 = pneg %p83
        %p301 = pneg %p80
        %p302 = pneg %p104
        %p303 = pneg %p101
        %p304 = pneg %p125
        %p305 = pneg %p122
        %p306 = pneg %p146
        %p307 = pneg %p143
        %p308 = pneg %p167
        %p309 = pneg %p164
        %p310 = pneg %p193
        %p311 = pneg %p190
        %p312 = scmp.lt.s32.totalorder %s20, 1
        %s313 = scalar_select %p312, %s20, 1
        %s314 = smul.addr %s313, 8
        %s315 = scalar_lea.vmem %s7, %s314
        %p316 = scmp.lt.s32.totalorder %s20, 1
        %s317 = scalar_select %p316, %s20, 1
        %s318 = smul.addr %s317, 8
        %s319 = scalar_lea.vmem %s0, %s318
        %p320 = scmp.lt.s32.totalorder %s20, 1
        %s321 = scalar_select %p320, %s20, 1
        %s322 = smul.addr %s321, 8
        %s323 = scalar_lea.vmem %s7, %s322
        %v324 = vld [vmem:[%s319] sm:$0xff]
        %v325 = vpack.c.bf16 %v324, %v324
        %v326 = vld [vmem:[#allocation2] sm:$0xf]
        %v327 = vld [vmem:[#allocation2 + $0x4] sm:$0xf]
        %v328 = vld [vmem:[#allocation2 + $0x8] sm:$0xf]
        %v329 = vld [vmem:[#allocation2 + $0xc] sm:$0xf]
        %v330 = vld [vmem:[#allocation2 + $0x10] sm:$0xf]
        %v331 = vld [vmem:[#allocation2 + $0x14] sm:$0xf]
        %v332 = vld [vmem:[#allocation2 + $0x18] sm:$0xf]
        %v333 = vld [vmem:[#allocation2 + $0x1c] sm:$0xf]
        %v334 = vld [vmem:[#allocation2 + $0x20] sm:$0xf]
        %v335 = vld [vmem:[#allocation2 + $0x24] sm:$0xf]
        %v336 = vld [vmem:[#allocation2 + $0x28] sm:$0xf]
        %v337 = vld [vmem:[#allocation2 + $0x2c] sm:$0xf]
        %v338 = vld [vmem:[#allocation2 + $0x30] sm:$0xf]
        %v339 = vld [vmem:[#allocation2 + $0x34] sm:$0xf]
        %v340 = vld [vmem:[#allocation2 + $0x38] sm:$0xf]
        %v341 = vld [vmem:[#allocation2 + $0x3c] sm:$0xf]
        %v342 = vld [vmem:[%s2] sm:$0x1]
        %v343 = vunpack.c.l.bf16 %v342
        %v344 = vperm.slane %v343, 0
        %v361 = vunpack.c.l.b16 %v326
        %v362 = vunpack.c.l.b16 %v327
        %v363 = vunpack.c.l.b16 %v328
        %v364 = vunpack.c.l.b16 %v329
        %v365 = vunpack.c.l.b16 %v330
        %v366 = vunpack.c.l.b16 %v331
        %v367 = vunpack.c.l.b16 %v332
        %v368 = vunpack.c.l.b16 %v333
        %v369 = vunpack.c.l.b16 %v334
        %v370 = vunpack.c.l.b16 %v335
        %v371 = vunpack.c.l.b16 %v336
        %v372 = vunpack.c.l.b16 %v337
        %v373 = vunpack.c.l.b16 %v338
        %v374 = vunpack.c.l.b16 %v339
        %v375 = vunpack.c.l.b16 %v340
        %v376 = vunpack.c.l.b16 %v341
        %v377 = vpack.c.b16 %v362, %v361
        %v378 = vpack.c.b16 %v364, %v363
        %v379 = vpack.c.b16 %v366, %v365
        %v380 = vpack.c.b16 %v368, %v367
        %v381 = vpack.c.b16 %v370, %v369
        %v382 = vpack.c.b16 %v372, %v371
        %v383 = vpack.c.b16 %v374, %v373
        %v384 = vpack.c.b16 %v376, %v375
        %393 = vmatpush.bf16.msra.mxu0 %v384
        %394 = vmatpush.bf16.msra.mxu0 %v383
        %395 = vmatpush.bf16.msra.mxu0 %v382
        %396 = vmatpush.bf16.msra.mxu0 %v381
        %397 = vmatpush.bf16.msra.mxu0 %v380
        %398 = vmatpush.bf16.msra.mxu0 %v379
        %399 = vmatpush.bf16.msra.mxu0 %v378
        %400 = vmatpush.bf16.msra.mxu0 %v377
        %401 = vmatmul.bf16.gmra.mxu0 %v325
        %v402 = vpop.f32.mrf.mxu0
        %v403 = vadd.f32 %v344, %v402
        %v404 = vpop.f32.mrf.mxu0
        %405 = vdwg.mxu0
        %v406 = vmax.f32 %v403, 0.0
        %v407 = vpack.c.bf16 %v406, %v406
        %v408 = vld [vmem:[#allocation4] sm:$0xf]
        %v409 = vld [vmem:[#allocation4 + $0x4] sm:$0xf]
        %v410 = vld [vmem:[#allocation4 + $0x8] sm:$0xf]
        %v411 = vld [vmem:[#allocation4 + $0xc] sm:$0xf]
        %v412 = vld [vmem:[#allocation4 + $0x10] sm:$0xf]
        %v413 = vld [vmem:[#allocation4 + $0x14] sm:$0xf]
        %v414 = vld [vmem:[#allocation4 + $0x18] sm:$0xf]
        %v415 = vld [vmem:[#allocation4 + $0x1c] sm:$0xf]
        %v416 = vld [vmem:[#allocation4 + $0x20] sm:$0xf]
        %v417 = vld [vmem:[#allocation4 + $0x24] sm:$0xf]
        %v418 = vld [vmem:[#allocation4 + $0x28] sm:$0xf]
        %v419 = vld [vmem:[#allocation4 + $0x2c] sm:$0xf]
        %v420 = vld [vmem:[#allocation4 + $0x30] sm:$0xf]
        %v421 = vld [vmem:[#allocation4 + $0x34] sm:$0xf]
        %v422 = vld [vmem:[#allocation4 + $0x38] sm:$0xf]
        %v423 = vld [vmem:[#allocation4 + $0x3c] sm:$0xf]
        %v424 = vld [vmem:[%s4] sm:$0x1]
        %v425 = vunpack.c.l.bf16 %v424
        %v426 = vperm.slane %v425, 0
        %v443 = vunpack.c.l.b16 %v408
        %v444 = vunpack.c.l.b16 %v409
        %v445 = vunpack.c.l.b16 %v410
        %v446 = vunpack.c.l.b16 %v411
        %v447 = vunpack.c.l.b16 %v412
        %v448 = vunpack.c.l.b16 %v413
        %v449 = vunpack.c.l.b16 %v414
        %v450 = vunpack.c.l.b16 %v415
        %v451 = vunpack.c.l.b16 %v416
        %v452 = vunpack.c.l.b16 %v417
        %v453 = vunpack.c.l.b16 %v418
        %v454 = vunpack.c.l.b16 %v419
        %v455 = vunpack.c.l.b16 %v420
        %v456 = vunpack.c.l.b16 %v421
        %v457 = vunpack.c.l.b16 %v422
        %v458 = vunpack.c.l.b16 %v423
        %v459 = vpack.c.b16 %v444, %v443
        %v460 = vpack.c.b16 %v446, %v445
        %v461 = vpack.c.b16 %v448, %v447
        %v462 = vpack.c.b16 %v450, %v449
        %v463 = vpack.c.b16 %v452, %v451
        %v464 = vpack.c.b16 %v454, %v453
        %v465 = vpack.c.b16 %v456, %v455
        %v466 = vpack.c.b16 %v458, %v457
        %475 = vmatpush.bf16.msra.mxu0 %v466
        %476 = vmatpush.bf16.msra.mxu0 %v465
        %477 = vmatpush.bf16.msra.mxu0 %v464
        %478 = vmatpush.bf16.msra.mxu0 %v463
        %479 = vmatpush.bf16.msra.mxu0 %v462
        %480 = vmatpush.bf16.msra.mxu0 %v461
        %481 = vmatpush.bf16.msra.mxu0 %v460
        %482 = vmatpush.bf16.msra.mxu0 %v459
        %483 = vmatmul.bf16.gmra.mxu0 %v407
        %v484 = vpop.f32.mrf.mxu0
        %v485 = vadd.f32 %v426, %v484
        %v486 = vpop.f32.mrf.mxu0
        %487 = vdwg.mxu0
        %v488 = vmax.f32 %v485, 0.0
        %v489 = vpack.c.bf16 %v488, %v488
        %v490 = vld [vmem:[#allocation6] sm:$0xf]
        %v491 = vld [vmem:[#allocation6 + $0x4] sm:$0xf]
        %v492 = vld [vmem:[#allocation6 + $0x8] sm:$0xf]
        %v493 = vld [vmem:[#allocation6 + $0xc] sm:$0xf]
        %v494 = vld [vmem:[#allocation6 + $0x10] sm:$0xf]
        %v495 = vld [vmem:[#allocation6 + $0x14] sm:$0xf]
        %v496 = vld [vmem:[#allocation6 + $0x18] sm:$0xf]
        %v497 = vld [vmem:[#allocation6 + $0x1c] sm:$0xf]
        %v498 = vld [vmem:[#allocation6 + $0x20] sm:$0xf]
        %v499 = vld [vmem:[#allocation6 + $0x24] sm:$0xf]
        %v500 = vld [vmem:[#allocation6 + $0x28] sm:$0xf]
        %v501 = vld [vmem:[#allocation6 + $0x2c] sm:$0xf]
        %v502 = vld [vmem:[#allocation6 + $0x30] sm:$0xf]
        %v503 = vld [vmem:[#allocation6 + $0x34] sm:$0xf]
        %v504 = vld [vmem:[#allocation6 + $0x38] sm:$0xf]
        %v505 = vld [vmem:[#allocation6 + $0x3c] sm:$0xf]
        %v506 = vld [vmem:[%s6] sm:$0x1]
        %v507 = vunpack.c.l.bf16 %v506
        %v508 = vperm.slane %v507, 0
        %v525 = vunpack.c.l.b16 %v490
        %v526 = vunpack.c.l.b16 %v491
        %v527 = vunpack.c.l.b16 %v492
        %v528 = vunpack.c.l.b16 %v493
        %v529 = vunpack.c.l.b16 %v494
        %v530 = vunpack.c.l.b16 %v495
        %v531 = vunpack.c.l.b16 %v496
        %v532 = vunpack.c.l.b16 %v497
        %v533 = vunpack.c.l.b16 %v498
        %v534 = vunpack.c.l.b16 %v499
        %v535 = vunpack.c.l.b16 %v500
        %v536 = vunpack.c.l.b16 %v501
        %v537 = vunpack.c.l.b16 %v502
        %v538 = vunpack.c.l.b16 %v503
        %v539 = vunpack.c.l.b16 %v504
        %v540 = vunpack.c.l.b16 %v505
        %v541 = vpack.c.b16 %v526, %v525
        %v542 = vpack.c.b16 %v528, %v527
        %v543 = vpack.c.b16 %v530, %v529
        %v544 = vpack.c.b16 %v532, %v531
        %v545 = vpack.c.b16 %v534, %v533
        %v546 = vpack.c.b16 %v536, %v535
        %v547 = vpack.c.b16 %v538, %v537
        %v548 = vpack.c.b16 %v540, %v539
        %557 = vmatpush.bf16.msra.mxu0 %v548
        %558 = vmatpush.bf16.msra.mxu0 %v547
        %559 = vmatpush.bf16.msra.mxu0 %v546
        %560 = vmatpush.bf16.msra.mxu0 %v545
        %561 = vmatpush.bf16.msra.mxu0 %v544
        %562 = vmatpush.bf16.msra.mxu0 %v543
        %563 = vmatpush.bf16.msra.mxu0 %v542
        %564 = vmatpush.bf16.msra.mxu0 %v541
        %565 = vmatmul.bf16.gmra.mxu0 %v489
        %v566 = vpop.f32.mrf.mxu0
        %v567 = vadd.f32 %v508, %v566
        %v568 = vpop.f32.mrf.mxu0
        %569 = vdwg.mxu0
        %570 = vst [vmem:[%s323] sm:$0xff] %v567
        %p571 = scmp.lt.s32.totalorder %s20, 1
        %s572 = scalar_select %p571, %s20, 1
        %s573 = smul.addr %s572, 8
        %s574 = scalar_lea.vmem %s7, %s573
        // Predicated region
        $region61: #{a_call__.1} parent=47 // pred_check
          %p575 = pneg %p190
        $region62: #{a_call__.1} parent=47 // pred_check_branch
          %577 = sbr.rel (%p575) target = $region64
        $region63: #{a_call__.1} parent=47 // pred_region
          _
        $region64: #{a_call__.1} parent=47 // pred_fallthru
          _
      $region48: #{a_call__.1} parent=5 // pred_fallthru
        _
      %p578 = scmp.le.s32.totalorder 2, %s15
      // Predicated region
      $region65: #{a_call__.1} parent=5 // pred_check
        %p579 = pneg %p578
      $region66: #{a_call__.1} parent=5 // pred_check_branch
        %581 = sbr.rel (%p579) target = $region68
      $region67: #{a_call__.1} parent=5 // pred_region
        %s582 = ssub.s32 %s15, 2
        // Predicated region
        $region69: #{a_call__.1} parent=67 // pred_check
          %p583 = pneg %p196
        $region70: #{a_call__.1} parent=67 // pred_check_branch
          %585 = sbr.rel (%p583) target = $region72
        $region71: #{a_call__.1} parent=67 // pred_region
          %p586 = scmp.lt.s32.totalorder %s21, 1
          %s587 = scalar_select %p586, %s21, 1
          %s588 = smul.addr %s587, 8
          %s589 = scalar_lea.vmem %s7, %s588
        $region72: #{a_call__.1} parent=67 // pred_fallthru
          _
      $region68: #{a_call__.1} parent=5 // pred_fallthru
        _
    $region6: #{a_call__.1} parent=1 // loop_footer
      %s19 = sadd.s32 1, %s15
    $region7: #{a_call__.1} parent=1 // loop_footer_branch
      %14 = sbr.rel target = $region3
    $region8: #{a_call__.1} parent=1 // loop_exit
      _
    %590 = vsyncpa [#allocation3], 1
    %s591 = scalar_lea.sflag [#allocation3], 1
    %592 = vsyncpa %s591, 1
    %593 = vsyncpa [#allocation5], 1

</llo_original>
